<compile_context>
chip_gen: v7x
topology: tpu7x:2x2x1
jax: 0.10.0
libtpu: 0.0.40
codegen_flags: <defaults>
</compile_context>

<pallas_src>
import functools

import jax
import jax.numpy as jnp
from jax.experimental import pallas as pl
from jax.experimental.pallas import tpu as pltpu


def _prescale_norm_kernel(g_ref, x_ref, o_ref, *, eps):
    # x_ref: (block_rows, dim) tile in VMEM; g_ref: (1,) scalar in SMEM.
    xf = x_ref[...].astype(jnp.float32)
    sq = jnp.sum(xf * xf, axis=-1, keepdims=True)
    # clamp(||x||, eps) == sqrt(max(sq, eps^2)) for non-negative norms, so
    # g / clamp(||x||, eps) == g * rsqrt(max(sq, eps^2)).  rsqrt runs on the
    # EUP (its own VLIW slot) and replaces the per-element divide by a mul.
    inv = g_ref[0] * jax.lax.rsqrt(jnp.maximum(sq, eps * eps))
    o_ref[...] = (xf * inv).astype(o_ref.dtype)


def _choose_block_rows(rows, dim, itemsize):
    """Pick a row-tile: ~2 MiB of f32 compute per tile, sublane aligned."""
    sub = max(8, 32 // itemsize)                     # 8 f32 / 16 bf16 / 32 int8
    target = (2 * 1024 * 1024) // max(dim * 4, 1)    # rows per ~2 MiB f32 tile
    br = max(sub, min(2048, (target // sub) * sub))
    # Keep >= ~8 grid steps when there is enough data so the single parallel
    # grid axis can be sharded across v7x's two TensorCores.
    while br > sub and pl.cdiv(rows, br) < 8:
        br = max(sub, ((br // 2) // sub) * sub)
    return br


def prescale_norm(x, g, eps=1e-5, block_rows=None):
    """x: (..., dim); g: scalar array shape (1,). Returns scale-normed x."""
    orig_shape = x.shape
    dim = orig_shape[-1]
    rows = 1
    for s in orig_shape[:-1]:
        rows *= s
    x2d = x.reshape(rows, dim)

    itemsize = jnp.dtype(x.dtype).itemsize
    if block_rows is None:
        block_rows = _choose_block_rows(rows, dim, itemsize)

    # Pad rows so the grid covers the array exactly (padded rows are zeros,
    # which are numerically safe under the eps^2 clamp); slice off afterwards.
    num_blocks = pl.cdiv(rows, block_rows)
    padded_rows = num_blocks * block_rows
    if padded_rows != rows:
        x2d = jnp.pad(x2d, ((0, padded_rows - rows), (0, 0)))

    grid = (num_blocks,)

    # Scoped VMEM: double-buffered native in + out tiles plus f32 temporaries.
    buf_bytes = block_rows * dim * itemsize
    f32_bytes = block_rows * dim * 4
    vmem_limit = 2 * 2 * buf_bytes + 4 * f32_bytes + (2 << 20)
    vmem_limit = int(min(max(vmem_limit, 16 << 20), 48 << 20))

    out = pl.pallas_call(
        functools.partial(_prescale_norm_kernel, eps=eps),
        out_shape=jax.ShapeDtypeStruct((padded_rows, dim), x.dtype),
        grid_spec=pltpu.PrefetchScalarGridSpec(
            num_scalar_prefetch=0,
            grid=grid,
            in_specs=[
                pl.BlockSpec(memory_space=pltpu.SMEM),              # g scalar
                pl.BlockSpec((block_rows, dim), lambda i: (i, 0)),  # x tile
            ],
            out_specs=pl.BlockSpec((block_rows, dim), lambda i: (i, 0)),
        ),
        compiler_params=pltpu.CompilerParams(
            dimension_semantics=("parallel",),
            vmem_limit_bytes=vmem_limit,
        ),
    )(g, x2d)

    if padded_rows != rows:
        out = out[:rows]
    return out.reshape(orig_shape)


def pre_scale_norm_forward(x, g, fn, eps=1e-5):
    """Full PreScaleNorm.forward: fn(scale_norm(x))."""
    return fn(prescale_norm(x, g, eps=eps))


def _reference(x, g, eps=1e-5):
    n = jnp.linalg.norm(x.astype(jnp.float32), axis=-1, keepdims=True)
    n = jnp.maximum(n, eps)
    return (x.astype(jnp.float32) / n * g[0]).astype(x.dtype)


if __name__ == "__main__":
    key = jax.random.PRNGKey(0)

    # Small shapes consistent with the module: batch=2, seq=8, hidden=32.
    batch, seq, hidden = 2, 8, 32
    x = jax.random.normal(key, (batch, seq, hidden), dtype=jnp.float32)

    # Deterministic parameter init: g = ones(1), as in nn.Parameter(torch.ones(1)).
    g = jnp.ones((1,), dtype=jnp.float32)

    # TODO(synk): `fn` is an arbitrary wrapped module in the original code;
    # identity is used here since no specific fn is specified.
    fn = lambda y: y

    out = pre_scale_norm_forward(x, g, fn)
    out = jax.block_until_ready(out)

    ref = _reference(x, g)
    assert out.shape == x.shape and out.dtype == x.dtype
    assert jnp.allclose(out, ref, atol=1e-5, rtol=1e-5), "mismatch vs reference"

    # Also exercise a shape whose row count is NOT a multiple of the block
    # (padding path) to confirm robustness of the new tiling.
    x2 = jax.random.normal(jax.random.PRNGKey(1), (3, 7, hidden), dtype=jnp.float32)
    out2 = jax.block_until_ready(prescale_norm(x2, g))
    assert jnp.allclose(out2, _reference(x2, g), atol=1e-5, rtol=1e-5)

    print("KERNEL_OK")
</pallas_src>

<mosaic_0001>
module attributes {stable_mosaic.version = 11 : i64} {
  func.func @_prescale_norm_kernel(%arg0: i32, %arg1: memref<1xf32, #tpu.memory_space<smem>>, %arg2: memref<8x32xf32, #tpu.memory_space<vmem>>, %arg3: memref<8x32xf32, #tpu.memory_space<vmem>>) attributes {dimension_semantics = [#tpu.dimension_semantics<parallel>], iteration_bounds = array<i64: 2>, scalar_prefetch = 0 : i64, scratch_operands = 0 : i64, tpu.core_type = #tpu.core_type<tc>, window_params = [{transform_indices = @transform_0, window_bounds = array<i64: 1>}, {transform_indices = @transform_1, window_bounds = array<i64: 8, 32>}, {transform_indices = @transform_2, window_bounds = array<i64: 8, 32>}]} {
    %c0 = arith.constant 0 : index
    %c0_0 = arith.constant 0 : index
    %0 = vector.load %arg2[%c0, %c0_0] : memref<8x32xf32, #tpu.memory_space<vmem>>, vector<8x32xf32>
    %1 = arith.mulf %0, %0 : vector<8x32xf32>
    %cst = arith.constant dense<0.000000e+00> : vector<8xf32>
    %2 = vector.multi_reduction <add>, %1, %cst [1] : vector<8x32xf32> to vector<8xf32>
    %3 = vector.shape_cast %2 : vector<8xf32> to vector<8x1xf32>
    %c0_1 = arith.constant 0 : index
    %4 = memref.load %arg1[%c0_1] : memref<1xf32, #tpu.memory_space<smem>>
    %cst_2 = arith.constant 1.000000e-10 : f32
    %5 = vector.broadcast %cst_2 : f32 to vector<8x1xf32>
    %6 = arith.maximumf %3, %5 : vector<8x1xf32>
    %7 = math.rsqrt %6 : vector<8x1xf32>
    %8 = vector.broadcast %4 : f32 to vector<8x1xf32>
    %9 = arith.mulf %8, %7 : vector<8x1xf32>
    %10 = vector.broadcast %9 : vector<8x1xf32> to vector<8x32xf32>
    %11 = arith.mulf %0, %10 : vector<8x32xf32>
    %c0_3 = arith.constant 0 : index
    %c0_4 = arith.constant 0 : index
    %12 = vector.load %arg3[%c0_3, %c0_4] : memref<8x32xf32, #tpu.memory_space<vmem>>, vector<8x32xf32>
    tpu.vector_store %arg3[%c0_3, %c0_4], %11 {strides = array<i32>} : memref<8x32xf32, #tpu.memory_space<vmem>>, vector<8x32xf32>,
    return
  }
  func.func @transform_0(%arg0: i32) -> i32 {
    %c0_i32 = arith.constant 0 : i32
    %c0_i32_0 = arith.constant 0 : i32
    return %c0_i32 : i32
  }
  func.func @transform_1(%arg0: i32) -> (i32, i32) {
    %c0_i32 = arith.constant 0 : i32
    %c0_i32_0 = arith.constant 0 : i32
    return %arg0, %c0_i32 : i32, i32
  }
  func.func @transform_2(%arg0: i32) -> (i32, i32) {
    %c0_i32 = arith.constant 0 : i32
    %c0_i32_0 = arith.constant 0 : i32
    return %arg0, %c0_i32 : i32, i32
  }
}

</mosaic_0001>

<llo_original>
// kernel: tpu_custom_call.1
$region0: #{tpu_custom_call.1}
  #allocation0 [shape = 'u32[]', space=smem, size = 0x4, offset = 0x4, fixed_abs, tag = 'smem constant byte address 0x4 - core index']
  #allocation1 [shape = 'u32[144,128]{1,0:T(1,128)}', space=vmem, size = 0x12000, scoped, tag = 'internal scratch']
  #allocation2 [shape = 'f32[1]{0:T(128)S(6)}', space=smem, size = 0x200, scoped, tag = 'scoped memory for tpu_custom_call.1']
  %s0 = inlined_call_operand.<no memory space> [shape: f32[1], index: 0, kind: input, shape index: {}]
  %s1 = inlined_call_operand.hbm [shape: f32[16,32], index: 1, kind: input, shape index: {}]
  %s2 = inlined_call_operand.hbm [shape: f32[16,32], index: 2, kind: output, shape index: {}]
  %s3 = sld [smem:[#allocation0]]
  $region45: #{tpu_custom_call.1} parent=0
    _
  %s5 = ssub.s32 1, %s3
  %s6 = scalar_select 0, %s5, %s3
  %7 = sst [smem:[#allocation2]] %s0
  $region1: #{tpu_custom_call.1} parent=0
    #allocation3 [shape = 'u8[8192]{0}', space=vmem, size = 0x2000, scoped, tag = 'input window, operand 1']
    #allocation4 [shape = 's32[2]{0}', space=sflag, size = 0x8, scoped, tag = 'scoped memory for tpu_custom_call.1']
    #allocation5 [shape = 's32[2]{0}', space=sflag, size = 0x8, scoped, tag = 'scoped memory for tpu_custom_call.1']
    #allocation6 [shape = 'u8[8192]{0}', space=vmem, size = 0x2000, scoped, tag = 'output window, operand 0']
    %8 = vsyncpa [#allocation4], 0
    %s9 = scalar_lea.sflag [#allocation4], 1
    %10 = vsyncpa %s9, 0
    %11 = vsyncpa [#allocation5], 0
    %s12 = scalar_lea.sflag [#allocation5], 1
    %13 = vsyncpa %s12, 0
    loop: start=0, step=1, limit=4
    $region2: #{tpu_custom_call.1} parent=1 // loop_pre_header
      _
    $region3: #{tpu_custom_call.1} parent=1 // loop_header
      %s15 = sphi 0, %s19
      %p16 = scmp.ge.s32.totalorder %s15, 4
      %s23 = sphi 0, %s23
      %s25 = sphi 0, %s23
      %s26 = sphi 0, %s25
      %s40 = sphi 0, %s26
      %s46 = sphi 0, %s48
      %s49 = sphi 0, %s46
      %s50 = sphi 0, %s49
      %s66 = sphi 0, %s50
      %s72 = sphi 0, %s74
      %s75 = sphi 0, %s72
      %s76 = sphi 0, %s75
      %s92 = sphi 0, %s76
    $region4: #{tpu_custom_call.1} parent=1 // loop_header_branch
      %18 = sbr.rel (%p16) target = $region8
    $region5: #{tpu_custom_call.1} parent=1 // loop_body
      %s20 = ssub.s32 %s15, 1
      %s21 = ssub.s32 %s15, 2
      %s22 = sadd.s32 %s15, 1
      %s24 = sadd.s32 %s23, 1
      %p27 = scmp.eq.s32.totalorder %s15, 1
      %p28 = scmp.ne.s32.totalorder %s23, %s25
      %p29 = scmp.eq.s32.totalorder %s15, 0
      %p30 = por %p28, %p29
      %p31 = scmp.ne.s32.totalorder %s23, %s25
      %p32 = scmp.eq.s32.totalorder %s20, 1
      %p33 = por %p31, %p32
      %p34 = scmp.ne.s32.totalorder %s25, %s26
      %p35 = scmp.eq.s32.totalorder %s20, 0
      %p36 = por %p34, %p35
      %p37 = scmp.ne.s32.totalorder %s25, %s26
      %p38 = scmp.eq.s32.totalorder %s21, 1
      %p39 = por %p37, %p38
      %p41 = scmp.ne.s32.totalorder %s26, %s40
      %p42 = scmp.eq.s32.totalorder %s21, 0
      %p43 = por %p41, %p42
      %s44 = ssub.s32 %s15, %s22
      %p45 = scmp.eq.s32.totalorder %s44, 0
      %s47 = sadd.s32 %s46, 1
      %s48 = scalar_select %p45, %s46, %s47
      %p51 = pneg %p45
      %p52 = scmp.eq.s32.totalorder %s15, 1
      %p53 = por %p51, %p52
      %p54 = scmp.ne.s32.totalorder %s46, %s49
      %p55 = scmp.eq.s32.totalorder %s15, 0
      %p56 = por %p54, %p55
      %p57 = scmp.ne.s32.totalorder %s46, %s49
      %p58 = scmp.eq.s32.totalorder %s20, 1
      %p59 = por %p57, %p58
      %p60 = scmp.ne.s32.totalorder %s49, %s50
      %p61 = scmp.eq.s32.totalorder %s20, 0
      %p62 = por %p60, %p61
      %p63 = scmp.ne.s32.totalorder %s49, %s50
      %p64 = scmp.eq.s32.totalorder %s21, 1
      %p65 = por %p63, %p64
      %p67 = scmp.ne.s32.totalorder %s50, %s66
      %p68 = scmp.eq.s32.totalorder %s21, 0
      %p69 = por %p67, %p68
      %s70 = ssub.s32 %s15, %s22
      %p71 = scmp.eq.s32.totalorder %s70, 0
      %s73 = sadd.s32 %s72, 1
      %s74 = scalar_select %p71, %s72, %s73
      %p77 = pneg %p71
      %p78 = scmp.eq.s32.totalorder %s15, 1
      %p79 = por %p77, %p78
      %p80 = scmp.ne.s32.totalorder %s72, %s75
      %p81 = scmp.eq.s32.totalorder %s15, 0
      %p82 = por %p80, %p81
      %p83 = scmp.ne.s32.totalorder %s72, %s75
      %p84 = scmp.eq.s32.totalorder %s20, 1
      %p85 = por %p83, %p84
      %p86 = scmp.ne.s32.totalorder %s75, %s76
      %p87 = scmp.eq.s32.totalorder %s20, 0
      %p88 = por %p86, %p87
      %p89 = scmp.ne.s32.totalorder %s75, %s76
      %p90 = scmp.eq.s32.totalorder %s21, 1
      %p91 = por %p89, %p90
      %p93 = scmp.ne.s32.totalorder %s76, %s92
      %p94 = scmp.eq.s32.totalorder %s21, 0
      %p95 = por %p93, %p94
      %p96 = scmp.le.s32.totalorder 1, %s15
      %p97 = scmp.lt.s32.totalorder %s15, 3
      %p98 = pnand %p96, %p97
      %p99 = pneg %p98
      // Predicated region
      $region9: #{tpu_custom_call.1} parent=5 // pred_check
        _
      $region10: #{tpu_custom_call.1} parent=5 // pred_check_branch
        %101 = sbr.rel (%p98) target = $region12
      $region11: #{tpu_custom_call.1} parent=5 // pred_region
        %s102 = ssub.s32 %s15, 1
        // Predicated region
        $region13: #{tpu_custom_call.1} parent=11 // pred_check
          %p103 = pneg %p36
        $region14: #{tpu_custom_call.1} parent=11 // pred_check_branch
          %105 = sbr.rel (%p103) target = $region16
        $region15: #{tpu_custom_call.1} parent=11 // pred_region
          _
        $region16: #{tpu_custom_call.1} parent=11 // pred_fallthru
          _
      $region12: #{tpu_custom_call.1} parent=5 // pred_fallthru
        _
      %p106 = scmp.lt.s32.totalorder %s15, 2
      // Predicated region
      $region17: #{tpu_custom_call.1} parent=5 // pred_check
        %p107 = pneg %p106
      $region18: #{tpu_custom_call.1} parent=5 // pred_check_branch
        %109 = sbr.rel (%p107) target = $region20
      $region19: #{tpu_custom_call.1} parent=5 // pred_region
        // Predicated region
        $region21: #{tpu_custom_call.1} parent=19 // pred_check
          %p110 = pneg %p56
        $region22: #{tpu_custom_call.1} parent=19 // pred_check_branch
          %112 = sbr.rel (%p110) target = $region24
        $region23: #{tpu_custom_call.1} parent=19 // pred_region
          %s113 = sand.u32 %s46, 1
          %s114 = scalar_lea.sflag [#allocation4], %s113
          %s115 = sand.u32 %s46, 1
          %s116 = smul.addr %s115, 8
          %s117 = scalar_lea.vmem [#allocation3], %s116
          %s119 = ssub.s32 128, 128
          %120 = vsyncadd %s114, %s119
          %s121 = smul.addr %s15, 128
          %s122 = scalar_lea.hbm %s1, %s121
          %s124 = sshll.u32 %s117, 4
          %s125 = int_to_ptr.vmem [resolvable:$true] %s124
          %127 = dma.hbm_to_vmem [thread:$0]  %s122, 128, %s125, %s114
        $region24: #{tpu_custom_call.1} parent=19 // pred_fallthru
          _
      $region20: #{tpu_custom_call.1} parent=5 // pred_fallthru
        _
      %p128 = scmp.le.s32.totalorder 1, %s15
      %p129 = scmp.lt.s32.totalorder %s15, 3
      %p130 = pnand %p128, %p129
      %p131 = pneg %p130
      // Predicated region
      $region25: #{tpu_custom_call.1} parent=5 // pred_check
        _
      $region26: #{tpu_custom_call.1} parent=5 // pred_check_branch
        %133 = sbr.rel (%p130) target = $region28
      $region27: #{tpu_custom_call.1} parent=5 // pred_region
        %s134 = ssub.s32 %s15, 1
        %s135 = sand.u32 %s49, 1
        %s136 = scalar_lea.sflag [#allocation4], %s135
        %s137 = sand.u32 %s49, 1
        %s138 = smul.addr %s137, 8
        %s139 = scalar_lea.vmem [#allocation3], %s138
        // Predicated region
        $region29: #{tpu_custom_call.1} parent=27 // pred_check
          %p140 = pneg %p62
        $region30: #{tpu_custom_call.1} parent=27 // pred_check_branch
          %142 = sbr.rel (%p140) target = $region32
        $region31: #{tpu_custom_call.1} parent=27 // pred_region
          %143 = dma.done %s136, 128
        $region32: #{tpu_custom_call.1} parent=27 // pred_fallthru
          _
        %p144 = pneg %p36
        %p145 = pneg %p33
        %s146 = sand.u32 %s49, 1
        %s147 = scalar_lea.sflag [#allocation4], %s146
        %s148 = sand.u32 %s49, 1
        %s149 = smul.addr %s148, 8
        %s150 = scalar_lea.vmem [#allocation3], %s149
        %p151 = pneg %p62
        %p152 = pneg %p59
        %p153 = pneg %p88
        %p154 = pneg %p85
        %s155 = sand.u32 %s75, 1
        %s156 = scalar_lea.sflag [#allocation5], %s155
        %s157 = sand.u32 %s75, 1
        %s158 = smul.addr %s157, 8
        %s159 = scalar_lea.vmem [#allocation6], %s158
        %v160 = vld [vmem:[%s139] sm:$0xff]
        %v161 = vmul.f32 %v160, %v160
        %vm162 = vcmask 261120
        %v163 = vsel %vm162, %v161, 0.0
        %164 = vadd.xlane.f32.xlu0 %v163
        %v165 = vpop.xlane.xlu0 %164
        %s166 = sld [smem:[#allocation2]]
        %v167 = vmax.f32 %v165, 1e-10
        %v168 = vrsqrt.pop %v167
        %v169 = vstv %s166
        %v170 = vmul.f32 %v169, %v168
        %v171 = vmul.f32 %v160, %v170
        %172 = vst.msk [vmem:[%s159] sm:$0xff] %vm162, %v171
        %s173 = sand.u32 %s75, 1
        %s174 = scalar_lea.sflag [#allocation5], %s173
        %s175 = sand.u32 %s75, 1
        %s176 = smul.addr %s175, 8
        %s177 = scalar_lea.vmem [#allocation6], %s176
        // Predicated region
        $region33: #{tpu_custom_call.1} parent=27 // pred_check
          %p178 = pneg %p85
        $region34: #{tpu_custom_call.1} parent=27 // pred_check_branch
          %180 = sbr.rel (%p178) target = $region36
        $region35: #{tpu_custom_call.1} parent=27 // pred_region
          %s182 = ssub.s32 128, 128
          %183 = vsyncadd %s174, %s182
          %s184 = smul.addr %s20, 128
          %s185 = scalar_lea.hbm %s2, %s184
          %s187 = sshll.u32 %s177, 4
          %s188 = int_to_ptr.vmem [resolvable:$true] %s187
          %190 = dma.vmem_to_hbm [thread:$0]  %s188, 128, %s185, %s174
        $region36: #{tpu_custom_call.1} parent=27 // pred_fallthru
          _
      $region28: #{tpu_custom_call.1} parent=5 // pred_fallthru
        _
      %p191 = scmp.le.s32.totalorder 2, %s15
      // Predicated region
      $region37: #{tpu_custom_call.1} parent=5 // pred_check
        %p192 = pneg %p191
      $region38: #{tpu_custom_call.1} parent=5 // pred_check_branch
        %194 = sbr.rel (%p192) target = $region40
      $region39: #{tpu_custom_call.1} parent=5 // pred_region
        %s195 = ssub.s32 %s15, 2
        // Predicated region
        $region41: #{tpu_custom_call.1} parent=39 // pred_check
          %p196 = pneg %p91
        $region42: #{tpu_custom_call.1} parent=39 // pred_check_branch
          %198 = sbr.rel (%p196) target = $region44
        $region43: #{tpu_custom_call.1} parent=39 // pred_region
          %s199 = sand.u32 %s76, 1
          %s200 = scalar_lea.sflag [#allocation5], %s199
          %s201 = sand.u32 %s76, 1
          %s202 = smul.addr %s201, 8
          %s203 = scalar_lea.vmem [#allocation6], %s202
          %204 = dma.done %s200, 128
        $region44: #{tpu_custom_call.1} parent=39 // pred_fallthru
          _
      $region40: #{tpu_custom_call.1} parent=5 // pred_fallthru
        _
    $region6: #{tpu_custom_call.1} parent=1 // loop_footer
      %s19 = sadd.s32 1, %s15
    $region7: #{tpu_custom_call.1} parent=1 // loop_footer_branch
      %14 = sbr.rel target = $region3
    $region8: #{tpu_custom_call.1} parent=1 // loop_exit
      _
    %205 = vsyncpa [#allocation4], 1
    %s206 = scalar_lea.sflag [#allocation4], 1
    %207 = vsyncpa %s206, 1
    %208 = vsyncpa [#allocation5], 1
    %s209 = scalar_lea.sflag [#allocation5], 1
    %210 = vsyncpa %s209, 1

</llo_original>
